<compile_context>
chip_gen: v7x
topology: tpu7x:2x2x1
jax: 0.10.0
libtpu: 0.0.40
codegen_flags: <defaults>
</compile_context>

<pallas_src>
import jax
import jax.numpy as jnp
import numpy as np
from jax import lax
from jax.experimental import pallas as pl
from jax.experimental.pallas import tpu as pltpu


# ---------------------------------------------------------------------------
# small helpers
# ---------------------------------------------------------------------------
def _round_up(x, m):
    return ((x + m - 1) // m) * m


def _row_tile(m):
    # multiples of 16 (bf16 sublane packing) that divide m; else one full block.
    for cand in (512, 256, 128, 64, 32, 16):
        if cand <= m and m % cand == 0:
            return cand
    return m


def _pad_gate_cols(w, h, h_pad):
    """(rows, 4*h) -> (rows, 4*h_pad): zero-pad each [i,f,g,o] gate block."""
    if h_pad == h:
        return w
    rows = w.shape[0]
    w4 = w.reshape(rows, 4, h)
    w4 = jnp.pad(w4, ((0, 0), (0, 0), (0, h_pad - h)))
    return w4.reshape(rows, 4 * h_pad)


def _choose_time_chunk(t, b_pad, h_pad, budget_bytes=24 * 1024 * 1024):
    # double-buffered per-timestep bytes: f32 gates (4H, both dirs) + f32 out (H, both dirs)
    per_t = 2 * (2 * b_pad * 4 * h_pad * 4 + 2 * b_pad * h_pad * 4)
    # resident bf16 recurrent weights (both dirs, assume double-buffered)
    resident = 2 * 2 * h_pad * 4 * h_pad * 2
    leftover = max(budget_bytes - resident, per_t)
    tc = int(max(1, min(t, 64, leftover // per_t)))
    t_pad = _round_up(t, tc)
    return tc, t_pad


def _choose_unroll(chunk, b_pad, h_pad):
    # keep the unrolled window's live f32 gate values well inside the vreg file
    step_bytes = 2 * b_pad * 4 * h_pad * 4
    unroll = max(1, min(8, (128 * 1024) // max(step_bytes, 1)))
    return int(min(unroll, chunk))


# ---------------------------------------------------------------------------
# Stage 1: hoisted input->gates matmul for ALL timesteps & both directions.
#   gf[m] = x[m] @ Wih_f + (b_ih_f + b_hh_f)   (bf16 operands, f32 accumulate)
#   gb[m] = x[m] @ Wih_b + (b_ih_b + b_hh_b)
# ---------------------------------------------------------------------------
def _input_gates_kernel(x_ref, wf_ref, wb_ref, bf_ref, bb_ref, gf_ref, gb_ref):
    x = x_ref[...]                                                   # (tm, D) bf16
    gf_ref[...] = (jnp.dot(x, wf_ref[...], preferred_element_type=jnp.float32)
                   + bf_ref[...])
    gb_ref[...] = (jnp.dot(x, wb_ref[...], preferred_element_type=jnp.float32)
                   + bb_ref[...])


def _input_gates(x_flat, w_f, w_b, b_f, b_b):
    m, d = x_flat.shape
    g4 = w_f.shape[1]                      # 4 * H_pad, multiple of 512
    tm = _row_tile(m)
    tn = 512 if g4 % 512 == 0 else g4
    return pl.pallas_call(
        _input_gates_kernel,
        out_shape=(jax.ShapeDtypeStruct((m, g4), jnp.float32),
                   jax.ShapeDtypeStruct((m, g4), jnp.float32)),
        grid=(m // tm, g4 // tn),
        in_specs=[
            pl.BlockSpec((tm, d), lambda i, j: (i, 0)),      # activations
            pl.BlockSpec((d, tn), lambda i, j: (0, j)),      # Wih fwd (bf16)
            pl.BlockSpec((d, tn), lambda i, j: (0, j)),      # Wih bwd (bf16)
            pl.BlockSpec((1, tn), lambda i, j: (0, j)),      # bias fwd (f32)
            pl.BlockSpec((1, tn), lambda i, j: (0, j)),      # bias bwd (f32)
        ],
        out_specs=(pl.BlockSpec((tm, tn), lambda i, j: (i, j)),
                   pl.BlockSpec((tm, tn), lambda i, j: (i, j))),
        compiler_params=pltpu.CompilerParams(
            dimension_semantics=("parallel", "parallel"),
            vmem_limit_bytes=32 * 1024 * 1024),
    )(x_flat, w_f, w_b, b_f, b_b)


# ---------------------------------------------------------------------------
# Stage 2: fused bidirectional recurrence, streamed over time chunks.
# Per step: two small (B,H)@(H,4H) bf16 dots (one per direction), all gate
# math in f32, lane-aligned slices/stores, state carried in VMEM scratch.
# ---------------------------------------------------------------------------
def _make_recurrent_kernel(chunk, pad_t, unroll):
    def kernel(gxf_ref, gxb_ref, whf_ref, whb_ref, out_f_ref, out_b_ref,
               hf_scr, cf_scr, hb_scr, cb_scr):
        hidden = out_f_ref.shape[-1]

        @pl.when(pl.program_id(0) == 0)
        def _():
            hf_scr[...] = jnp.zeros_like(hf_scr)
            cf_scr[...] = jnp.zeros_like(cf_scr)
            hb_scr[...] = jnp.zeros_like(hb_scr)
            cb_scr[...] = jnp.zeros_like(cb_scr)

        def lstm_cell(gates, c_prev):
            # PyTorch gate order [i, f, g, o]; slices are lane-aligned (H % 128 == 0).
            i_g = jax.nn.sigmoid(gates[:, 0 * hidden:1 * hidden])
            f_g = jax.nn.sigmoid(gates[:, 1 * hidden:2 * hidden])
            g_g = jnp.tanh(gates[:, 2 * hidden:3 * hidden])
            o_g = jax.nn.sigmoid(gates[:, 3 * hidden:4 * hidden])
            c_new = f_g * c_prev + i_g * g_g
            h_new = o_g * jnp.tanh(c_new)
            return h_new, c_new

        def step(s, carry):
            h_f, c_f, h_b, c_b = carry

            gates_f = gxf_ref[s] + jnp.dot(
                h_f.astype(jnp.bfloat16), whf_ref[...],
                preferred_element_type=jnp.float32)
            h_f_new, c_f_new = lstm_cell(gates_f, c_f)

            gates_b = gxb_ref[chunk - 1 - s] + jnp.dot(
                h_b.astype(jnp.bfloat16), whb_ref[...],
                preferred_element_type=jnp.float32)
            h_b_new, c_b_new = lstm_cell(gates_b, c_b)

            if pad_t:
                # Time padding sits at the *start* of the backward direction's
                # processing order; keep its state at zero through pad steps.
                keep = (pl.program_id(0) * chunk + s) >= pad_t
                h_b_new = jnp.where(keep, h_b_new, h_b)
                c_b_new = jnp.where(keep, c_b_new, c_b)

            out_f_ref[s] = h_f_new.astype(out_f_ref.dtype)
            out_b_ref[chunk - 1 - s] = h_b_new.astype(out_b_ref.dtype)
            return h_f_new, c_f_new, h_b_new, c_b_new

        carry0 = (hf_scr[...], cf_scr[...], hb_scr[...], cb_scr[...])
        h_f, c_f, h_b, c_b = lax.fori_loop(0, chunk, step, carry0, unroll=unroll)
        hf_scr[...] = h_f
        cf_scr[...] = c_f
        hb_scr[...] = h_b
        cb_scr[...] = c_b

    return kernel


# ---------------------------------------------------------------------------
# Encoder.forward
# ---------------------------------------------------------------------------
def encoder_forward(x, params):
    """x: (B, T, dim_word) -> (B, T, 2*dim_hidden), matching nn.LSTM bidirectional."""
    B, T, D = x.shape
    H = params["whh_f"].shape[0]

    H_pad = _round_up(H, 128)     # lane-aligned gate slices / output stores
    B_pad = _round_up(B, 8)       # full-sublane tiles

    # --- pack / zero-pad parameters (tiny, one-time; exact: padded units stay 0) ---
    wih_f = _pad_gate_cols(params["wih_f"], H, H_pad).astype(jnp.bfloat16)   # (D, 4Hp)
    wih_b = _pad_gate_cols(params["wih_b"], H, H_pad).astype(jnp.bfloat16)
    b_f = _pad_gate_cols(params["b_f"], H, H_pad)                            # (1, 4Hp) f32
    b_b = _pad_gate_cols(params["b_b"], H, H_pad)
    whh_f_p = jnp.pad(_pad_gate_cols(params["whh_f"], H, H_pad),
                      ((0, H_pad - H), (0, 0))).astype(jnp.bfloat16)         # (Hp, 4Hp)
    whh_b_p = jnp.pad(_pad_gate_cols(params["whh_b"], H, H_pad),
                      ((0, H_pad - H), (0, 0))).astype(jnp.bfloat16)

    Tc, T_pad = _choose_time_chunk(T, B_pad, H_pad)
    NC = T_pad // Tc
    pad_t = T_pad - T

    # --- Stage 1: all-timestep input->gates matmul (bf16 MXU), time-major ---
    x_tm = jnp.transpose(x, (1, 0, 2)).astype(jnp.bfloat16)                  # (T, B, D)
    x_tm = jnp.pad(x_tm, ((0, pad_t), (0, B_pad - B), (0, 0)))
    gf_flat, gb_flat = _input_gates(x_tm.reshape(T_pad * B_pad, D),
                                    wih_f, wih_b, b_f, b_b)
    gx_f = gf_flat.reshape(T_pad, B_pad, 4 * H_pad)
    gx_b = gb_flat.reshape(T_pad, B_pad, 4 * H_pad)

    # --- Stage 2: fused bidirectional recurrence over time chunks ---
    unroll = _choose_unroll(Tc, B_pad, H_pad)
    kernel = _make_recurrent_kernel(Tc, pad_t, unroll)

    out_f, out_b = pl.pallas_call(
        kernel,
        out_shape=(jax.ShapeDtypeStruct((T_pad, B_pad, H_pad), jnp.float32),
                   jax.ShapeDtypeStruct((T_pad, B_pad, H_pad), jnp.float32)),
        grid=(NC,),
        in_specs=[
            pl.BlockSpec((Tc, B_pad, 4 * H_pad), lambda k: (k, 0, 0)),           # fwd gates
            pl.BlockSpec((Tc, B_pad, 4 * H_pad), lambda k: (NC - 1 - k, 0, 0)),  # bwd gates
            pl.BlockSpec((H_pad, 4 * H_pad), lambda k: (0, 0)),                  # Whh fwd (bf16)
            pl.BlockSpec((H_pad, 4 * H_pad), lambda k: (0, 0)),                  # Whh bwd (bf16)
        ],
        out_specs=(
            pl.BlockSpec((Tc, B_pad, H_pad), lambda k: (k, 0, 0)),
            pl.BlockSpec((Tc, B_pad, H_pad), lambda k: (NC - 1 - k, 0, 0)),
        ),
        scratch_shapes=[pltpu.VMEM((B_pad, H_pad), jnp.float32)] * 4,  # h_f, c_f, h_b, c_b
        compiler_params=pltpu.CompilerParams(
            dimension_semantics=("arbitrary",),          # recurrence carried in scratch
            vmem_limit_bytes=40 * 1024 * 1024),
    )(gx_f, gx_b, whh_f_p, whh_b_p)

    out = jnp.concatenate([out_f[:T, :B, :H], out_b[:T, :B, :H]], axis=-1)   # (T, B, 2H)
    return jnp.transpose(out, (1, 0, 2))                                     # (B, T, 2H)


# ---------------------------------------------------------------------------
# Parameters + pure-JAX reference (correctness check).
# ---------------------------------------------------------------------------
def init_params(key, dim_word, dim_hidden):
    """nn.LSTM-style params: weights pre-transposed, biases (b_ih+b_hh) merged."""
    H, D = dim_hidden, dim_word
    k = 1.0 / np.sqrt(H)
    keys = jax.random.split(key, 8)

    def u(kk, shape):
        return jax.random.uniform(kk, shape, jnp.float32, minval=-k, maxval=k)

    wih_f = u(keys[0], (4 * H, D)).T          # (D, 4H)
    whh_f = u(keys[1], (4 * H, H)).T          # (H, 4H)
    b_f = (u(keys[2], (4 * H,)) + u(keys[3], (4 * H,))).reshape(1, 4 * H)
    wih_b = u(keys[4], (4 * H, D)).T
    whh_b = u(keys[5], (4 * H, H)).T
    b_b = (u(keys[6], (4 * H,)) + u(keys[7], (4 * H,))).reshape(1, 4 * H)
    return dict(wih_f=wih_f, whh_f=whh_f, b_f=b_f,
                wih_b=wih_b, whh_b=whh_b, b_b=b_b)


def _ref_dir(x, wih, whh, b, reverse):
    B, T, D = x.shape
    H = whh.shape[0]

    def step(carry, x_t):
        h, c = carry
        gates = x_t @ wih + h @ whh + b
        i = jax.nn.sigmoid(gates[:, :H])
        f = jax.nn.sigmoid(gates[:, H:2 * H])
        g = jnp.tanh(gates[:, 2 * H:3 * H])
        o = jax.nn.sigmoid(gates[:, 3 * H:])
        c = f * c + i * g
        h = o * jnp.tanh(c)
        return (h, c), h

    xs = jnp.transpose(x, (1, 0, 2))
    if reverse:
        xs = xs[::-1]
    _, hs = lax.scan(step, (jnp.zeros((B, H)), jnp.zeros((B, H))), xs)
    if reverse:
        hs = hs[::-1]
    return jnp.transpose(hs, (1, 0, 2))


def encoder_ref(x, p):
    out_f = _ref_dir(x, p["wih_f"], p["whh_f"], p["b_f"], reverse=False)
    out_b = _ref_dir(x, p["wih_b"], p["whh_b"], p["b_b"], reverse=True)
    return jnp.concatenate([out_f, out_b], axis=-1)


if __name__ == "__main__":
    dim_word, dim_hidden = 32, 32
    batch, length = 2, 8

    key = jax.random.PRNGKey(0)
    k_x, k_p = jax.random.split(key)
    x = jax.random.normal(k_x, (batch, length, dim_word), jnp.float32)
    params = init_params(k_p, dim_word, dim_hidden)

    out = jax.block_until_ready(encoder_forward(x, params))
    assert out.shape == (batch, length, 2 * dim_hidden)

    ref = jax.block_until_ready(encoder_ref(x, params))
    np.testing.assert_allclose(np.asarray(out), np.asarray(ref),
                               rtol=1e-2, atol=1e-2)

    print("KERNEL_OK")
</pallas_src>

<mosaic_0001>
module attributes {stable_mosaic.version = 11 : i64} {
  func.func @_input_gates_kernel(%arg0: i32, %arg1: i32, %arg2: memref<64x32xbf16, #tpu.memory_space<vmem>>, %arg3: memref<32x512xbf16, #tpu.memory_space<vmem>>, %arg4: memref<32x512xbf16, #tpu.memory_space<vmem>>, %arg5: memref<1x512xf32, #tpu.memory_space<vmem>>, %arg6: memref<1x512xf32, #tpu.memory_space<vmem>>, %arg7: memref<64x512xf32, #tpu.memory_space<vmem>>, %arg8: memref<64x512xf32, #tpu.memory_space<vmem>>) attributes {dimension_semantics = [#tpu.dimension_semantics<parallel>, #tpu.dimension_semantics<parallel>], iteration_bounds = array<i64: 1, 1>, scalar_prefetch = 0 : i64, scratch_operands = 0 : i64, tpu.core_type = #tpu.core_type<tc>, window_params = [{transform_indices = @transform_0, window_bounds = array<i64: 64, 32>}, {transform_indices = @transform_1, window_bounds = array<i64: 32, 512>}, {transform_indices = @transform_2, window_bounds = array<i64: 32, 512>}, {transform_indices = @transform_3, window_bounds = array<i64: 1, 512>}, {transform_indices = @transform_4, window_bounds = array<i64: 1, 512>}, {transform_indices = @transform_5, window_bounds = array<i64: 64, 512>}, {transform_indices = @transform_6, window_bounds = array<i64: 64, 512>}]} {
    %c0 = arith.constant 0 : index
    %c0_0 = arith.constant 0 : index
    %0 = vector.load %arg2[%c0, %c0_0] : memref<64x32xbf16, #tpu.memory_space<vmem>>, vector<64x32xbf16>
    %c0_1 = arith.constant 0 : index
    %c0_2 = arith.constant 0 : index
    %1 = vector.load %arg3[%c0_1, %c0_2] : memref<32x512xbf16, #tpu.memory_space<vmem>>, vector<32x512xbf16>
    %cst = arith.constant dense<0.000000e+00> : vector<64x512xf32>
    %2 = tpu.matmul %0, %1, %cst {dimension_numbers = #tpu.dot_dimension_numbers<[1], [0], [0], [1], [0, 0, 1, 1], [], []>} : vector<64x32xbf16>, vector<32x512xbf16>, vector<64x512xf32> -> vector<64x512xf32>
    %c0_3 = arith.constant 0 : index
    %c0_4 = arith.constant 0 : index
    %3 = vector.load %arg5[%c0_3, %c0_4] : memref<1x512xf32, #tpu.memory_space<vmem>>, vector<1x512xf32>
    %4 = vector.broadcast %3 : vector<1x512xf32> to vector<64x512xf32>
    %5 = arith.addf %2, %4 : vector<64x512xf32>
    %c0_5 = arith.constant 0 : index
    %c0_6 = arith.constant 0 : index
    %6 = vector.load %arg7[%c0_5, %c0_6] : memref<64x512xf32, #tpu.memory_space<vmem>>, vector<64x512xf32>
    tpu.vector_store %arg7[%c0_5, %c0_6], %5 {strides = array<i32>} : memref<64x512xf32, #tpu.memory_space<vmem>>, vector<64x512xf32>,
    %c0_7 = arith.constant 0 : index
    %c0_8 = arith.constant 0 : index
    %7 = vector.load %arg4[%c0_7, %c0_8] : memref<32x512xbf16, #tpu.memory_space<vmem>>, vector<32x512xbf16>
    %cst_9 = arith.constant dense<0.000000e+00> : vector<64x512xf32>
    %8 = tpu.matmul %0, %7, %cst_9 {dimension_numbers = #tpu.dot_dimension_numbers<[1], [0], [0], [1], [0, 0, 1, 1], [], []>} : vector<64x32xbf16>, vector<32x512xbf16>, vector<64x512xf32> -> vector<64x512xf32>
    %c0_10 = arith.constant 0 : index
    %c0_11 = arith.constant 0 : index
    %9 = vector.load %arg6[%c0_10, %c0_11] : memref<1x512xf32, #tpu.memory_space<vmem>>, vector<1x512xf32>
    %10 = vector.broadcast %9 : vector<1x512xf32> to vector<64x512xf32>
    %11 = arith.addf %8, %10 : vector<64x512xf32>
    %c0_12 = arith.constant 0 : index
    %c0_13 = arith.constant 0 : index
    %12 = vector.load %arg8[%c0_12, %c0_13] : memref<64x512xf32, #tpu.memory_space<vmem>>, vector<64x512xf32>
    tpu.vector_store %arg8[%c0_12, %c0_13], %11 {strides = array<i32>} : memref<64x512xf32, #tpu.memory_space<vmem>>, vector<64x512xf32>,
    return
  }
  func.func @transform_0(%arg0: i32, %arg1: i32) -> (i32, i32) {
    %c0_i32 = arith.constant 0 : i32
    %c0_i32_0 = arith.constant 0 : i32
    return %arg0, %c0_i32 : i32, i32
  }
  func.func @transform_1(%arg0: i32, %arg1: i32) -> (i32, i32) {
    %c0_i32 = arith.constant 0 : i32
    %c0_i32_0 = arith.constant 0 : i32
    return %c0_i32, %arg1 : i32, i32
  }
  func.func @transform_2(%arg0: i32, %arg1: i32) -> (i32, i32) {
    %c0_i32 = arith.constant 0 : i32
    %c0_i32_0 = arith.constant 0 : i32
    return %c0_i32, %arg1 : i32, i32
  }
  func.func @transform_3(%arg0: i32, %arg1: i32) -> (i32, i32) {
    %c0_i32 = arith.constant 0 : i32
    %c0_i32_0 = arith.constant 0 : i32
    return %c0_i32, %arg1 : i32, i32
  }
  func.func @transform_4(%arg0: i32, %arg1: i32) -> (i32, i32) {
    %c0_i32 = arith.constant 0 : i32
    %c0_i32_0 = arith.constant 0 : i32
    return %c0_i32, %arg1 : i32, i32
  }
  func.func @transform_5(%arg0: i32, %arg1: i32) -> (i32, i32) {
    %c0_i32 = arith.constant 0 : i32
    return %arg0, %arg1 : i32, i32
  }
  func.func @transform_6(%arg0: i32, %arg1: i32) -> (i32, i32) {
    %c0_i32 = arith.constant 0 : i32
    return %arg0, %arg1 : i32, i32
  }
}

</mosaic_0001>

<llo_original>
// kernel: tpu_custom_call.1
$region0: #{tpu_custom_call.1}
  #allocation0 [shape = 'u32[]', space=smem, size = 0x4, offset = 0x4, fixed_abs, tag = 'smem constant byte address 0x4 - core index']
  #allocation1 [shape = 'u32[144,128]{1,0:T(1,128)}', space=vmem, size = 0x12000, scoped, tag = 'internal scratch']
  %s0 = inlined_call_operand.vmem [shape: bf16[64,32], index: 0, kind: input, shape index: {}]
  %s1 = inlined_call_operand.hbm [shape: bf16[32,512], index: 1, kind: input, shape index: {}]
  %s2 = inlined_call_operand.hbm [shape: bf16[32,512], index: 2, kind: input, shape index: {}]
  %s3 = inlined_call_operand.vmem [shape: f32[1,512], index: 3, kind: input, shape index: {}]
  %s4 = inlined_call_operand.vmem [shape: f32[1,512], index: 4, kind: input, shape index: {}]
  %s5 = inlined_call_operand.hbm [shape: f32[64,512], index: 5, kind: output, shape index: {0}]
  %s6 = inlined_call_operand.hbm [shape: f32[64,512], index: 6, kind: output, shape index: {1}]
  %7 = xla_tuple %s5, %s6
  %s8 = sld [smem:[#allocation0]]
  $region46: #{tpu_custom_call.1} parent=0
    _
  %s10 = ssub.s32 1, %s8
  %s11 = scalar_select 0, %s10, %s8
  $region1: #{tpu_custom_call.1} parent=0
    #allocation2 [shape = 'u8[32768]{0}', space=vmem, size = 0x8000, scoped, tag = 'input window, operand 1, single buffered']
    #allocation3 [shape = 's32[1]{0}', space=sflag, size = 0x4, scoped, tag = 'scoped memory for tpu_custom_call.1']
    #allocation4 [shape = 's32[1]{0}', space=sflag, size = 0x4, scoped, tag = 'scoped memory for tpu_custom_call.1']
    #allocation5 [shape = 'u8[32768]{0}', space=vmem, size = 0x8000, scoped, tag = 'input window, operand 2, single buffered']
    #allocation6 [shape = 's32[1]{0}', space=sflag, size = 0x4, scoped, tag = 'scoped memory for tpu_custom_call.1']
    #allocation7 [shape = 'u8[131072]{0}', space=vmem, size = 0x20000, scoped, tag = 'output window, operand 0, single buffered']
    #allocation8 [shape = 'u8[131072]{0}', space=vmem, size = 0x20000, scoped, tag = 'output window, operand 1, single buffered']
    #allocation9 [shape = 's32[1]{0}', space=sflag, size = 0x4, scoped, tag = 'scoped memory for tpu_custom_call.1']
    %12 = vsyncpa [#allocation3], 0
    %13 = vsyncpa [#allocation6], 0
    %14 = vsyncpa [#allocation4], 0
    %15 = vsyncpa [#allocation9], 0
    // Predicated region
    $region2: #{tpu_custom_call.1} parent=1 // pred_check
      _
    $region3: #{tpu_custom_call.1} parent=1 // pred_check_branch
      %17 = sbr.rel (0) target = $region5
    $region4: #{tpu_custom_call.1} parent=1 // pred_region
      _
    $region5: #{tpu_custom_call.1} parent=1 // pred_fallthru
      _
    // Predicated region
    $region6: #{tpu_custom_call.1} parent=1 // pred_check
      _
    $region7: #{tpu_custom_call.1} parent=1 // pred_check_branch
      %19 = sbr.rel (0) target = $region9
    $region8: #{tpu_custom_call.1} parent=1 // pred_region
      %s21 = ssub.s32 1024, 1024
      %22 = vsyncadd [#allocation3], %s21
      %s23 = sshll.u32 [#allocation2], 4
      %s24 = int_to_ptr.vmem [resolvable:$true] %s23
      %29 = dma.hbm_to_vmem [thread:$0]  %s1, 1024, %s24, [#allocation3], 256, 256, 16
    $region9: #{tpu_custom_call.1} parent=1 // pred_fallthru
      _
    // Predicated region
    $region10: #{tpu_custom_call.1} parent=1 // pred_check
      _
    $region11: #{tpu_custom_call.1} parent=1 // pred_check_branch
      %31 = sbr.rel (0) target = $region13
    $region12: #{tpu_custom_call.1} parent=1 // pred_region
      %s33 = ssub.s32 1024, 1024
      %34 = vsyncadd [#allocation6], %s33
      %s35 = sshll.u32 [#allocation5], 4
      %s36 = int_to_ptr.vmem [resolvable:$true] %s35
      %41 = dma.hbm_to_vmem [thread:$0]  %s2, 1024, %s36, [#allocation6], 256, 256, 16
    $region13: #{tpu_custom_call.1} parent=1 // pred_fallthru
      _
    // Predicated region
    $region14: #{tpu_custom_call.1} parent=1 // pred_check
      _
    $region15: #{tpu_custom_call.1} parent=1 // pred_check_branch
      %43 = sbr.rel (0) target = $region17
    $region16: #{tpu_custom_call.1} parent=1 // pred_region
      _
    $region17: #{tpu_custom_call.1} parent=1 // pred_fallthru
      _
    // Predicated region
    $region18: #{tpu_custom_call.1} parent=1 // pred_check
      _
    $region19: #{tpu_custom_call.1} parent=1 // pred_check_branch
      %45 = sbr.rel (0) target = $region21
    $region20: #{tpu_custom_call.1} parent=1 // pred_region
      _
    $region21: #{tpu_custom_call.1} parent=1 // pred_fallthru
      _
    // Predicated region
    $region22: #{tpu_custom_call.1} parent=1 // pred_check
      _
    $region23: #{tpu_custom_call.1} parent=1 // pred_check_branch
      %47 = sbr.rel (0) target = $region25
    $region24: #{tpu_custom_call.1} parent=1 // pred_region
      %48 = dma.done [#allocation3], 1024
    $region25: #{tpu_custom_call.1} parent=1 // pred_fallthru
      _
    // Predicated region
    $region26: #{tpu_custom_call.1} parent=1 // pred_check
      _
    $region27: #{tpu_custom_call.1} parent=1 // pred_check_branch
      %50 = sbr.rel (0) target = $region29
    $region28: #{tpu_custom_call.1} parent=1 // pred_region
      %51 = dma.done [#allocation6], 1024
    $region29: #{tpu_custom_call.1} parent=1 // pred_fallthru
      _
    %v53 = vld [vmem:[%s0] sm:$0xf]
    %v54 = vld [vmem:[%s0 + $0x4] sm:$0xf]
    %v55 = vld [vmem:[%s0 + $0x8] sm:$0xf]
    %v56 = vld [vmem:[%s0 + $0xc] sm:$0xf]
    %v57 = vld [vmem:[%s0 + $0x10] sm:$0xf]
    %v58 = vld [vmem:[%s0 + $0x14] sm:$0xf]
    %v59 = vld [vmem:[%s0 + $0x18] sm:$0xf]
    %v60 = vld [vmem:[%s0 + $0x1c] sm:$0xf]
    %v61 = vld [vmem:[#allocation2] sm:$0xff]
    %v62 = vld [vmem:[#allocation2 + $0x8] sm:$0xff]
    %v63 = vld [vmem:[#allocation2 + $0x10] sm:$0xff]
    %v64 = vld [vmem:[#allocation2 + $0x18] sm:$0xff]
    %v65 = vld [vmem:[#allocation2 + $0x20] sm:$0xff]
    %v66 = vld [vmem:[#allocation2 + $0x28] sm:$0xff]
    %v67 = vld [vmem:[#allocation2 + $0x30] sm:$0xff]
    %v68 = vld [vmem:[#allocation2 + $0x38] sm:$0xff]
    %v69 = vld [vmem:[%s3] sm:$0xf]
    %v71 = vlaneseq
    %v72 = vshrl.u32 %v71, 7
    %v73 = vsub.s32 0, %v72
    %v74 = vrot.slane %v69, %v73
    %v75 = vlaneseq
    %v76 = vshrl.u32 %v75, 7
    %v77 = vsub.s32 1, %v76
    %v78 = vrot.slane %v69, %v77
    %v79 = vlaneseq
    %v80 = vshrl.u32 %v79, 7
    %v81 = vsub.s32 2, %v80
    %v82 = vrot.slane %v69, %v81
    %v83 = vlaneseq
    %v84 = vshrl.u32 %v83, 7
    %v85 = vsub.s32 3, %v84
    %v86 = vrot.slane %v69, %v85
    %v99 = vunpack.c.l.b16 %v53
    %v100 = vunpack.c.l.b16 %v54
    %v101 = vunpack.c.l.b16 %v55
    %v102 = vunpack.c.l.b16 %v56
    %v103 = vunpack.c.l.b16 %v57
    %v104 = vunpack.c.l.b16 %v58
    %v105 = vunpack.c.l.b16 %v59
    %v106 = vunpack.c.l.b16 %v60
    %v107 = vpack.c.b16 %v100, %v99
    %v108 = vpack.c.b16 %v102, %v101
    %v109 = vpack.c.b16 %v104, %v103
    %v110 = vpack.c.b16 %v106, %v105
    %v119 = vunpack.c.l.b16 %v61
    %v120 = vunpack.c.h.b16 %v61
    %v121 = vunpack.c.l.b16 %v62
    %v122 = vunpack.c.h.b16 %v62
    %v123 = vunpack.c.l.b16 %v63
    %v124 = vunpack.c.h.b16 %v63
    %v125 = vunpack.c.l.b16 %v64
    %v126 = vunpack.c.h.b16 %v64
    %v127 = vunpack.c.l.b16 %v65
    %v128 = vunpack.c.h.b16 %v65
    %v129 = vunpack.c.l.b16 %v66
    %v130 = vunpack.c.h.b16 %v66
    %v131 = vunpack.c.l.b16 %v67
    %v132 = vunpack.c.h.b16 %v67
    %v133 = vunpack.c.l.b16 %v68
    %v134 = vunpack.c.h.b16 %v68
    %v135 = vpack.c.b16 %v123, %v119
    %v136 = vpack.c.b16 %v124, %v120
    %v137 = vpack.c.b16 %v125, %v121
    %v138 = vpack.c.b16 %v126, %v122
    %v139 = vpack.c.b16 %v131, %v127
    %v140 = vpack.c.b16 %v132, %v128
    %v141 = vpack.c.b16 %v133, %v129
    %v142 = vpack.c.b16 %v134, %v130
    %vm151 = vcmask 261120
    %v153 = vsel %vm151, %v107, 0
    %v156 = vsel %vm151, %v108, 0
    %v159 = vsel %vm151, %v109, 0
    %v162 = vsel %vm151, %v110, 0
    %164 = vmatprep.subr.bf16.mxu0 %v136
    %165 = vmatpush1.bf16.msra.mxu0 %v135
    %166 = vmatprep.subr.bf16.mxu0 %v140
    %167 = vmatpush1.bf16.msra.mxu0 %v139
    %168 = vmatprep.subr.bf16.mxu0 0
    %169 = vmatpush1.bf16.msra.mxu0 0
    %170 = vmatprep.subr.bf16.mxu0 0
    %171 = vmatpush1.bf16.msra.mxu0 0
    %172 = vmatprep.subr.bf16.mxu0 0
    %173 = vmatpush1.bf16.msra.mxu0 0
    %174 = vmatprep.subr.bf16.mxu0 0
    %175 = vmatpush1.bf16.msra.mxu0 0
    %176 = vmatprep.subr.bf16.mxu0 0
    %177 = vmatpush1.bf16.msra.mxu0 0
    %178 = vmatprep.subr.bf16.mxu0 0
    %179 = vmatpush1.bf16.msra.mxu0 0
    %180 = vmatprep.subr.bf16.mxu0 0
    %181 = vmatpush1.bf16.msra.mxu0 0
    %182 = vmatprep.subr.bf16.mxu0 0
    %183 = vmatpush1.bf16.msra.mxu0 0
    %184 = vmatprep.subr.bf16.mxu0 0
    %185 = vmatpush1.bf16.msra.mxu0 0
    %186 = vmatprep.subr.bf16.mxu0 0
    %187 = vmatpush1.bf16.msra.mxu0 0
    %188 = vmatprep.subr.bf16.mxu0 0
    %189 = vmatpush1.bf16.msra.mxu0 0
    %190 = vmatprep.subr.bf16.mxu0 0
    %191 = vmatpush1.bf16.msra.mxu0 0
    %192 = vmatprep.subr.bf16.mxu0 0
    %193 = vmatpush1.bf16.msra.mxu0 0
    %194 = vmatprep.subr.bf16.mxu0 0
    %195 = vmatpush1.bf16.msra.mxu0 0
    %196 = vmatprep.mubr.bf16.mxu0 0
    %197 = vmatmul.mubr.bf16.gmra.mrb[0].mxu0 %v153
    %v198 = vpop.f32.mrb[0].mxu0
    %v199 = vadd.f32 %v74, %v198
    %v200 = vpop.f32.mrb[0].mxu0
    %v201 = vadd.f32 %v78, %v200
    %v202 = vpop.f32.mrb[0].mxu0
    %v203 = vadd.f32 %v74, %v202
    %v204 = vpop.f32.mrb[0].mxu0
    %v205 = vadd.f32 %v78, %v204
    %206 = vmatprep.mubr.bf16.mxu0 0
    %207 = vmatmul.mubr.bf16.gmra.mrb[0].mxu0 %v156
    %v208 = vpop.f32.mrb[0].mxu0
    %v209 = vadd.f32 %v74, %v208
    %v210 = vpop.f32.mrb[0].mxu0
    %v211 = vadd.f32 %v78, %v210
    %v212 = vpop.f32.mrb[0].mxu0
    %v213 = vadd.f32 %v74, %v212
    %v214 = vpop.f32.mrb[0].mxu0
    %v215 = vadd.f32 %v78, %v214
    %216 = vmatprep.mubr.bf16.mxu0 0
    %217 = vmatmul.mubr.bf16.gmra.mrb[0].mxu0 %v159
    %v218 = vpop.f32.mrb[0].mxu0
    %v219 = vadd.f32 %v74, %v218
    %v220 = vpop.f32.mrb[0].mxu0
    %v221 = vadd.f32 %v78, %v220
    %v222 = vpop.f32.mrb[0].mxu0
    %v223 = vadd.f32 %v74, %v222
    %v224 = vpop.f32.mrb[0].mxu0
    %v225 = vadd.f32 %v78, %v224
    %226 = vmatprep.mubr.bf16.mxu0 0
    %227 = vmatmul.mubr.bf16.gmra.mrb[0].mxu0 %v162
    %v228 = vpop.f32.mrb[0].mxu0
    %v229 = vadd.f32 %v74, %v228
    %v230 = vpop.f32.mrb[0].mxu0
    %v231 = vadd.f32 %v78, %v230
    %v232 = vpop.f32.mrb[0].mxu0
    %v233 = vadd.f32 %v74, %v232
    %v234 = vpop.f32.mrb[0].mxu0
    %v235 = vadd.f32 %v78, %v234
    %236 = vdwg.mxu0
    %237 = vmatprep.subr.bf16.mxu0 %v138
    %238 = vmatpush1.bf16.msra.mxu0 %v137
    %239 = vmatprep.subr.bf16.mxu0 %v142
    %240 = vmatpush1.bf16.msra.mxu0 %v141
    %241 = vmatprep.subr.bf16.mxu0 0
    %242 = vmatpush1.bf16.msra.mxu0 0
    %243 = vmatprep.subr.bf16.mxu0 0
    %244 = vmatpush1.bf16.msra.mxu0 0
    %245 = vmatprep.subr.bf16.mxu0 0
    %246 = vmatpush1.bf16.msra.mxu0 0
    %247 = vmatprep.subr.bf16.mxu0 0
    %248 = vmatpush1.bf16.msra.mxu0 0
    %249 = vmatprep.subr.bf16.mxu0 0
    %250 = vmatpush1.bf16.msra.mxu0 0
    %251 = vmatprep.subr.bf16.mxu0 0
    %252 = vmatpush1.bf16.msra.mxu0 0
    %253 = vmatprep.subr.bf16.mxu0 0
    %254 = vmatpush1.bf16.msra.mxu0 0
    %255 = vmatprep.subr.bf16.mxu0 0
    %256 = vmatpush1.bf16.msra.mxu0 0
    %257 = vmatprep.subr.bf16.mxu0 0
    %258 = vmatpush1.bf16.msra.mxu0 0
    %259 = vmatprep.subr.bf16.mxu0 0
    %260 = vmatpush1.bf16.msra.mxu0 0
    %261 = vmatprep.subr.bf16.mxu0 0
    %262 = vmatpush1.bf16.msra.mxu0 0
    %263 = vmatprep.subr.bf16.mxu0 0
    %264 = vmatpush1.bf16.msra.mxu0 0
    %265 = vmatprep.subr.bf16.mxu0 0
    %266 = vmatpush1.bf16.msra.mxu0 0
    %267 = vmatprep.subr.bf16.mxu0 0
    %268 = vmatpush1.bf16.msra.mxu0 0
    %269 = vmatprep.mubr.bf16.mxu0 0
    %270 = vmatmul.mubr.bf16.gmra.mrb[0].mxu0 %v153
    %v271 = vpop.f32.mrb[0].mxu0
    %v272 = vadd.f32 %v82, %v271
    %v273 = vpop.f32.mrb[0].mxu0
    %v274 = vadd.f32 %v86, %v273
    %v275 = vpop.f32.mrb[0].mxu0
    %v276 = vadd.f32 %v82, %v275
    %v277 = vpop.f32.mrb[0].mxu0
    %v278 = vadd.f32 %v86, %v277
    %279 = vmatprep.mubr.bf16.mxu0 0
    %280 = vmatmul.mubr.bf16.gmra.mrb[0].mxu0 %v156
    %v281 = vpop.f32.mrb[0].mxu0
    %v282 = vadd.f32 %v82, %v281
    %v283 = vpop.f32.mrb[0].mxu0
    %v284 = vadd.f32 %v86, %v283
    %v285 = vpop.f32.mrb[0].mxu0
    %v286 = vadd.f32 %v82, %v285
    %v287 = vpop.f32.mrb[0].mxu0
    %v288 = vadd.f32 %v86, %v287
    %289 = vmatprep.mubr.bf16.mxu0 0
    %290 = vmatmul.mubr.bf16.gmra.mrb[0].mxu0 %v159
    %v291 = vpop.f32.mrb[0].mxu0
    %v292 = vadd.f32 %v82, %v291
    %v293 = vpop.f32.mrb[0].mxu0
    %v294 = vadd.f32 %v86, %v293
    %v295 = vpop.f32.mrb[0].mxu0
    %v296 = vadd.f32 %v82, %v295
    %v297 = vpop.f32.mrb[0].mxu0
    %v298 = vadd.f32 %v86, %v297
    %299 = vmatprep.mubr.bf16.mxu0 0
    %300 = vmatmul.mubr.bf16.gmra.mrb[0].mxu0 %v162
    %v301 = vpop.f32.mrb[0].mxu0
    %v302 = vadd.f32 %v82, %v301
    %v303 = vpop.f32.mrb[0].mxu0
    %v304 = vadd.f32 %v86, %v303
    %v305 = vpop.f32.mrb[0].mxu0
    %v306 = vadd.f32 %v82, %v305
    %v307 = vpop.f32.mrb[0].mxu0
    %v308 = vadd.f32 %v86, %v307
    %309 = vdwg.mxu0
    %310 = vst [vmem:[#allocation7] sm:$0xff] %v199
    %311 = vst [vmem:[#allocation7 + $0x8] sm:$0xff] %v201
    %312 = vst [vmem:[#allocation7 + $0x10] sm:$0xff] %v272
    %313 = vst [vmem:[#allocation7 + $0x18] sm:$0xff] %v274
    %314 = vst [vmem:[#allocation7 + $0x20] sm:$0xff] %v203
    %315 = vst [vmem:[#allocation7 + $0x28] sm:$0xff] %v205
    %316 = vst [vmem:[#allocation7 + $0x30] sm:$0xff] %v276
    %317 = vst [vmem:[#allocation7 + $0x38] sm:$0xff] %v278
    %318 = vst [vmem:[#allocation7 + $0x40] sm:$0xff] %v209
    %319 = vst [vmem:[#allocation7 + $0x48] sm:$0xff] %v211
    %320 = vst [vmem:[#allocation7 + $0x50] sm:$0xff] %v282
    %321 = vst [vmem:[#allocation7 + $0x58] sm:$0xff] %v284
    %322 = vst [vmem:[#allocation7 + $0x60] sm:$0xff] %v213
    %323 = vst [vmem:[#allocation7 + $0x68] sm:$0xff] %v215
    %324 = vst [vmem:[#allocation7 + $0x70] sm:$0xff] %v286
    %325 = vst [vmem:[#allocation7 + $0x78] sm:$0xff] %v288
    %326 = vst [vmem:[#allocation7 + $0x80] sm:$0xff] %v219
    %327 = vst [vmem:[#allocation7 + $0x88] sm:$0xff] %v221
    %328 = vst [vmem:[#allocation7 + $0x90] sm:$0xff] %v292
    %329 = vst [vmem:[#allocation7 + $0x98] sm:$0xff] %v294
    %330 = vst [vmem:[#allocation7 + $0xa0] sm:$0xff] %v223
    %331 = vst [vmem:[#allocation7 + $0xa8] sm:$0xff] %v225
    %332 = vst [vmem:[#allocation7 + $0xb0] sm:$0xff] %v296
    %333 = vst [vmem:[#allocation7 + $0xb8] sm:$0xff] %v298
    %334 = vst [vmem:[#allocation7 + $0xc0] sm:$0xff] %v229
    %335 = vst [vmem:[#allocation7 + $0xc8] sm:$0xff] %v231
    %336 = vst [vmem:[#allocation7 + $0xd0] sm:$0xff] %v302
    %337 = vst [vmem:[#allocation7 + $0xd8] sm:$0xff] %v304
    %338 = vst [vmem:[#allocation7 + $0xe0] sm:$0xff] %v233
    %339 = vst [vmem:[#allocation7 + $0xe8] sm:$0xff] %v235
    %340 = vst [vmem:[#allocation7 + $0xf0] sm:$0xff] %v306
    %341 = vst [vmem:[#allocation7 + $0xf8] sm:$0xff] %v308
    %v342 = vld [vmem:[#allocation5] sm:$0xff]
    %v343 = vld [vmem:[#allocation5 + $0x8] sm:$0xff]
    %v344 = vld [vmem:[#allocation5 + $0x10] sm:$0xff]
    %v345 = vld [vmem:[#allocation5 + $0x18] sm:$0xff]
    %v346 = vld [vmem:[#allocation5 + $0x20] sm:$0xff]
    %v347 = vld [vmem:[#allocation5 + $0x28] sm:$0xff]
    %v348 = vld [vmem:[#allocation5 + $0x30] sm:$0xff]
    %v349 = vld [vmem:[#allocation5 + $0x38] sm:$0xff]
    %v350 = vld [vmem:[%s4] sm:$0xf]
    %v352 = vlaneseq
    %v353 = vshrl.u32 %v352, 7
    %v354 = vsub.s32 0, %v353
    %v355 = vrot.slane %v350, %v354
    %v356 = vlaneseq
    %v357 = vshrl.u32 %v356, 7
    %v358 = vsub.s32 1, %v357
    %v359 = vrot.slane %v350, %v358
    %v360 = vlaneseq
    %v361 = vshrl.u32 %v360, 7
    %v362 = vsub.s32 2, %v361
    %v363 = vrot.slane %v350, %v362
    %v364 = vlaneseq
    %v365 = vshrl.u32 %v364, 7
    %v366 = vsub.s32 3, %v365
    %v367 = vrot.slane %v350, %v366
    %v380 = vunpack.c.l.b16 %v342
    %v381 = vunpack.c.h.b16 %v342
    %v382 = vunpack.c.l.b16 %v343
    %v383 = vunpack.c.h.b16 %v343
    %v384 = vunpack.c.l.b16 %v344
    %v385 = vunpack.c.h.b16 %v344
    %v386 = vunpack.c.l.b16 %v345
    %v387 = vunpack.c.h.b16 %v345
    %v388 = vunpack.c.l.b16 %v346
    %v389 = vunpack.c.h.b16 %v346
    %v390 = vunpack.c.l.b16 %v347
    %v391 = vunpack.c.h.b16 %v347
    %v392 = vunpack.c.l.b16 %v348
    %v393 = vunpack.c.h.b16 %v348
    %v394 = vunpack.c.l.b16 %v349
    %v395 = vunpack.c.h.b16 %v349
    %v396 = vpack.c.b16 %v384, %v380
    %v397 = vpack.c.b16 %v385, %v381
    %v398 = vpack.c.b16 %v386, %v382
    %v399 = vpack.c.b16 %v387, %v383
    %v400 = vpack.c.b16 %v392, %v388
    %v401 = vpack.c.b16 %v393, %v389
    %v402 = vpack.c.b16 %v394, %v390
    %v403 = vpack.c.b16 %v395, %v391
    %412 = vmatprep.subr.bf16.mxu0 %v397
    %413 = vmatpush1.bf16.msra.mxu0 %v396
    %414 = vmatprep.subr.bf16.mxu0 %v401
    %415 = vmatpush1.bf16.msra.mxu0 %v400
    %416 = vmatprep.subr.bf16.mxu0 0
    %417 = vmatpush1.bf16.msra.mxu0 0
    %418 = vmatprep.subr.bf16.mxu0 0
    %419 = vmatpush1.bf16.msra.mxu0 0
    %420 = vmatprep.subr.bf16.mxu0 0
    %421 = vmatpush1.bf16.msra.mxu0 0
    %422 = vmatprep.subr.bf16.mxu0 0
    %423 = vmatpush1.bf16.msra.mxu0 0
    %424 = vmatprep.subr.bf16.mxu0 0
    %425 = vmatpush1.bf16.msra.mxu0 0
    %426 = vmatprep.subr.bf16.mxu0 0
    %427 = vmatpush1.bf16.msra.mxu0 0
    %428 = vmatprep.subr.bf16.mxu0 0
    %429 = vmatpush1.bf16.msra.mxu0 0
    %430 = vmatprep.subr.bf16.mxu0 0
    %431 = vmatpush1.bf16.msra.mxu0 0
    %432 = vmatprep.subr.bf16.mxu0 0
    %433 = vmatpush1.bf16.msra.mxu0 0
    %434 = vmatprep.subr.bf16.mxu0 0
    %435 = vmatpush1.bf16.msra.mxu0 0
    %436 = vmatprep.subr.bf16.mxu0 0
    %437 = vmatpush1.bf16.msra.mxu0 0
    %438 = vmatprep.subr.bf16.mxu0 0
    %439 = vmatpush1.bf16.msra.mxu0 0
    %440 = vmatprep.subr.bf16.mxu0 0
    %441 = vmatpush1.bf16.msra.mxu0 0
    %442 = vmatprep.subr.bf16.mxu0 0
    %443 = vmatpush1.bf16.msra.mxu0 0
    %444 = vmatprep.mubr.bf16.mxu0 0
    %445 = vmatmul.mubr.bf16.gmra.mrb[0].mxu0 %v153
    %v446 = vpop.f32.mrb[0].mxu0
    %v447 = vadd.f32 %v355, %v446
    %v448 = vpop.f32.mrb[0].mxu0
    %v449 = vadd.f32 %v359, %v448
    %v450 = vpop.f32.mrb[0].mxu0
    %v451 = vadd.f32 %v355, %v450
    %v452 = vpop.f32.mrb[0].mxu0
    %v453 = vadd.f32 %v359, %v452
    %454 = vmatprep.mubr.bf16.mxu0 0
    %455 = vmatmul.mubr.bf16.gmra.mrb[0].mxu0 %v156
    %v456 = vpop.f32.mrb[0].mxu0
    %v457 = vadd.f32 %v355, %v456
    %v458 = vpop.f32.mrb[0].mxu0
    %v459 = vadd.f32 %v359, %v458
    %v460 = vpop.f32.mrb[0].mxu0
    %v461 = vadd.f32 %v355, %v460
    %v462 = vpop.f32.mrb[0].mxu0
    %v463 = vadd.f32 %v359, %v462
    %464 = vmatprep.mubr.bf16.mxu0 0
    %465 = vmatmul.mubr.bf16.gmra.mrb[0].mxu0 %v159
    %v466 = vpop.f32.mrb[0].mxu0
    %v467 = vadd.f32 %v355, %v466
    %v468 = vpop.f32.mrb[0].mxu0
    %v469 = vadd.f32 %v359, %v468
    %v470 = vpop.f32.mrb[0].mxu0
    %v471 = vadd.f32 %v355, %v470
    %v472 = vpop.f32.mrb[0].mxu0
    %v473 = vadd.f32 %v359, %v472
    %474 = vmatprep.mubr.bf16.mxu0 0
    %475 = vmatmul.mubr.bf16.gmra.mrb[0].mxu0 %v162
    %v476 = vpop.f32.mrb[0].mxu0
    %v477 = vadd.f32 %v355, %v476
    %v478 = vpop.f32.mrb[0].mxu0
    %v479 = vadd.f32 %v359, %v478
    %v480 = vpop.f32.mrb[0].mxu0
    %v481 = vadd.f32 %v355, %v480
    %v482 = vpop.f32.mrb[0].mxu0
    %v483 = vadd.f32 %v359, %v482
    %484 = vdwg.mxu0
    %485 = vmatprep.subr.bf16.mxu0 %v399
    %486 = vmatpush1.bf16.msra.mxu0 %v398
    %487 = vmatprep.subr.bf16.mxu0 %v403
    %488 = vmatpush1.bf16.msra.mxu0 %v402
    %489 = vmatprep.subr.bf16.mxu0 0
    %490 = vmatpush1.bf16.msra.mxu0 0
    %491 = vmatprep.subr.bf16.mxu0 0
    %492 = vmatpush1.bf16.msra.mxu0 0
    %493 = vmatprep.subr.bf16.mxu0 0
    %494 = vmatpush1.bf16.msra.mxu0 0
    %495 = vmatprep.subr.bf16.mxu0 0
    %496 = vmatpush1.bf16.msra.mxu0 0
    %497 = vmatprep.subr.bf16.mxu0 0
    %498 = vmatpush1.bf16.msra.mxu0 0
    %499 = vmatprep.subr.bf16.mxu0 0
    %500 = vmatpush1.bf16.msra.mxu0 0
    %501 = vmatprep.subr.bf16.mxu0 0
    %502 = vmatpush1.bf16.msra.mxu0 0
    %503 = vmatprep.subr.bf16.mxu0 0
    %504 = vmatpush1.bf16.msra.mxu0 0
    %505 = vmatprep.subr.bf16.mxu0 0
    %506 = vmatpush1.bf16.msra.mxu0 0
    %507 = vmatprep.subr.bf16.mxu0 0
    %508 = vmatpush1.bf16.msra.mxu0 0
    %509 = vmatprep.subr.bf16.mxu0 0
    %510 = vmatpush1.bf16.msra.mxu0 0
    %511 = vmatprep.subr.bf16.mxu0 0
    %512 = vmatpush1.bf16.msra.mxu0 0
    %513 = vmatprep.subr.bf16.mxu0 0
    %514 = vmatpush1.bf16.msra.mxu0 0
    %515 = vmatprep.subr.bf16.mxu0 0
    %516 = vmatpush1.bf16.msra.mxu0 0
    %517 = vmatprep.mubr.bf16.mxu0 0
    %518 = vmatmul.mubr.bf16.gmra.mrb[0].mxu0 %v153
    %v519 = vpop.f32.mrb[0].mxu0
    %v520 = vadd.f32 %v363, %v519
    %v521 = vpop.f32.mrb[0].mxu0
    %v522 = vadd.f32 %v367, %v521
    %v523 = vpop.f32.mrb[0].mxu0
    %v524 = vadd.f32 %v363, %v523
    %v525 = vpop.f32.mrb[0].mxu0
    %v526 = vadd.f32 %v367, %v525
    %527 = vmatprep.mubr.bf16.mxu0 0
    %528 = vmatmul.mubr.bf16.gmra.mrb[0].mxu0 %v156
    %v529 = vpop.f32.mrb[0].mxu0
    %v530 = vadd.f32 %v363, %v529
    %v531 = vpop.f32.mrb[0].mxu0
    %v532 = vadd.f32 %v367, %v531
    %v533 = vpop.f32.mrb[0].mxu0
    %v534 = vadd.f32 %v363, %v533
    %v535 = vpop.f32.mrb[0].mxu0
    %v536 = vadd.f32 %v367, %v535
    %537 = vmatprep.mubr.bf16.mxu0 0
    %538 = vmatmul.mubr.bf16.gmra.mrb[0].mxu0 %v159
    %v539 = vpop.f32.mrb[0].mxu0
    %v540 = vadd.f32 %v363, %v539
    %v541 = vpop.f32.mrb[0].mxu0
    %v542 = vadd.f32 %v367, %v541
    %v543 = vpop.f32.mrb[0].mxu0
    %v544 = vadd.f32 %v363, %v543
    %v545 = vpop.f32.mrb[0].mxu0
    %v546 = vadd.f32 %v367, %v545
    %547 = vmatprep.mubr.bf16.mxu0 0
    %548 = vmatmul.mubr.bf16.gmra.mrb[0].mxu0 %v162
    %v549 = vpop.f32.mrb[0].mxu0
    %v550 = vadd.f32 %v363, %v549
    %v551 = vpop.f32.mrb[0].mxu0
    %v552 = vadd.f32 %v367, %v551
    %v553 = vpop.f32.mrb[0].mxu0
    %v554 = vadd.f32 %v363, %v553
    %v555 = vpop.f32.mrb[0].mxu0
    %v556 = vadd.f32 %v367, %v555
    %557 = vdwg.mxu0
    %558 = vst [vmem:[#allocation8] sm:$0xff] %v447
    %559 = vst [vmem:[#allocation8 + $0x8] sm:$0xff] %v449
    %560 = vst [vmem:[#allocation8 + $0x10] sm:$0xff] %v520
    %561 = vst [vmem:[#allocation8 + $0x18] sm:$0xff] %v522
    %562 = vst [vmem:[#allocation8 + $0x20] sm:$0xff] %v451
    %563 = vst [vmem:[#allocation8 + $0x28] sm:$0xff] %v453
    %564 = vst [vmem:[#allocation8 + $0x30] sm:$0xff] %v524
    %565 = vst [vmem:[#allocation8 + $0x38] sm:$0xff] %v526
    %566 = vst [vmem:[#allocation8 + $0x40] sm:$0xff] %v457
    %567 = vst [vmem:[#allocation8 + $0x48] sm:$0xff] %v459
    %568 = vst [vmem:[#allocation8 + $0x50] sm:$0xff] %v530
    %569 = vst [vmem:[#allocation8 + $0x58] sm:$0xff] %v532
    %570 = vst [vmem:[#allocation8 + $0x60] sm:$0xff] %v461
    %571 = vst [vmem:[#allocation8 + $0x68] sm:$0xff] %v463
    %572 = vst [vmem:[#allocation8 + $0x70] sm:$0xff] %v534
    %573 = vst [vmem:[#allocation8 + $0x78] sm:$0xff] %v536
    %574 = vst [vmem:[#allocation8 + $0x80] sm:$0xff] %v467
    %575 = vst [vmem:[#allocation8 + $0x88] sm:$0xff] %v469
    %576 = vst [vmem:[#allocation8 + $0x90] sm:$0xff] %v540
    %577 = vst [vmem:[#allocation8 + $0x98] sm:$0xff] %v542
    %578 = vst [vmem:[#allocation8 + $0xa0] sm:$0xff] %v471
    %579 = vst [vmem:[#allocation8 + $0xa8] sm:$0xff] %v473
    %580 = vst [vmem:[#allocation8 + $0xb0] sm:$0xff] %v544
    %581 = vst [vmem:[#allocation8 + $0xb8] sm:$0xff] %v546
    %582 = vst [vmem:[#allocation8 + $0xc0] sm:$0xff] %v477
    %583 = vst [vmem:[#allocation8 + $0xc8] sm:$0xff] %v479
    %584 = vst [vmem:[#allocation8 + $0xd0] sm:$0xff] %v550
    %585 = vst [vmem:[#allocation8 + $0xd8] sm:$0xff] %v552
    %586 = vst [vmem:[#allocation8 + $0xe0] sm:$0xff] %v481
    %587 = vst [vmem:[#allocation8 + $0xe8] sm:$0xff] %v483
    %588 = vst [vmem:[#allocation8 + $0xf0] sm:$0xff] %v554
    %589 = vst [vmem:[#allocation8 + $0xf8] sm:$0xff] %v556
    // Predicated region
    $region30: #{tpu_custom_call.1} parent=1 // pred_check
      _
    $region31: #{tpu_custom_call.1} parent=1 // pred_check_branch
      %591 = sbr.rel (0) target = $region33
    $region32: #{tpu_custom_call.1} parent=1 // pred_region
      %s593 = ssub.s32 4096, 4096
      %594 = vsyncadd [#allocation4], %s593
      %s595 = sshll.u32 [#allocation7], 4
      %s596 = int_to_ptr.vmem [resolvable:$true] %s595
      %601 = dma.vmem_to_hbm [thread:$0]  %s596, 4096, %s5, [#allocation4], 512, 512, 32
    $region33: #{tpu_custom_call.1} parent=1 // pred_fallthru
      _
    // Predicated region
    $region34: #{tpu_custom_call.1} parent=1 // pred_check
      _
    $region35: #{tpu_custom_call.1} parent=1 // pred_check_branch
      %603 = sbr.rel (0) target = $region37
    $region36: #{tpu_custom_call.1} parent=1 // pred_region
      %s605 = ssub.s32 4096, 4096
      %606 = vsyncadd [#allocation9], %s605
      %s607 = sshll.u32 [#allocation8], 4
      %s608 = int_to_ptr.vmem [resolvable:$true] %s607
      %613 = dma.vmem_to_hbm [thread:$0]  %s608, 4096, %s6, [#allocation9], 512, 512, 32
    $region37: #{tpu_custom_call.1} parent=1 // pred_fallthru
      _
    // Predicated region
    $region38: #{tpu_custom_call.1} parent=1 // pred_check
      _
    $region39: #{tpu_custom_call.1} parent=1 // pred_check_branch
      %615 = sbr.rel (0) target = $region41
    $region40: #{tpu_custom_call.1} parent=1 // pred_region
      %616 = dma.done [#allocation4], 4096
    $region41: #{tpu_custom_call.1} parent=1 // pred_fallthru
      _
    // Predicated region
    $region42: #{tpu_custom_call.1} parent=1 // pred_check
      _
    $region43: #{tpu_custom_call.1} parent=1 // pred_check_branch
      %618 = sbr.rel (0) target = $region45
    $region44: #{tpu_custom_call.1} parent=1 // pred_region
      %619 = dma.done [#allocation9], 4096
    $region45: #{tpu_custom_call.1} parent=1 // pred_fallthru
      _
    %620 = vsyncpa [#allocation3], 1
    %621 = vsyncpa [#allocation6], 1
    %622 = vsyncpa [#allocation4], 1
    %623 = vsyncpa [#allocation9], 1

</llo_original>
